<compile_context>
chip_gen: v5e
topology: v5e:2x2
jax: 0.10.0
libtpu: 0.0.40
codegen_flags: <defaults>
</compile_context>

<pallas_src>
import jax
import jax.numpy as jnp
from jax.experimental import pallas as pl
from jax.experimental.pallas import tpu as pltpu


def _make_encoder_kernel(num_layers):
    """Builds the per-timestep RNN kernel for a fixed (static) layer count."""
    n_in = 2 + 3 * num_layers  # x_t, h0, then (wih_t, whh_t, bias) per layer

    def kernel(*refs):
        x_ref = refs[0]            # (1, B, E)   embedded input for timestep t
        h0_ref = refs[1]           # (L, B, H)   initial hidden state (resident)
        layer_refs = refs[2:n_in]  # per layer: wih^T, whh^T, combined bias
        states_ref = refs[n_in]    # (1, L, B, H) output tile for timestep t
        h_scratch = refs[n_in + 1]  # (L, B, H)  VMEM carry across grid steps

        t = pl.program_id(0)

        @pl.when(t == 0)
        def _():
            h_scratch[...] = h0_ref[...]

        x = x_ref[0]                                   # (B, E) layer-0 input
        for l in range(num_layers):                    # static, unrolled
            wih_t = layer_refs[3 * l][...]             # (E_in, H)
            whh_t = layer_refs[3 * l + 1][...]         # (H, H)
            bias = layer_refs[3 * l + 2][...]          # (1, H) = b_ih + b_hh
            h_prev = h_scratch[l]                      # (B, H)
            h_new = jnp.tanh(
                jnp.dot(x, wih_t, preferred_element_type=jnp.float32)
                + jnp.dot(h_prev, whh_t, preferred_element_type=jnp.float32)
                + bias)
            h_scratch[l] = h_new
            x = h_new                                  # feeds next layer

        # encoder_states[t] = current_state  (full (L, B, H) slab, one store)
        states_ref[0] = h_scratch[...]

    return kernel


def encoder_forward(input_ids, h0, params):
    """input_ids: (B, S) int32 tokens, h0: (L, B, H) float32.

    Returns (encoder_states, final_state) with shapes (S, L, B, H) and
    (L, B, H), matching Encoder.forward for cell_type != 'lstm'.
    """
    emb_table, layers = params
    B, S = input_ids.shape
    L, b2, H = h0.shape
    assert b2 == B
    E = emb_table.shape[1]

    # TODO(synk): embedding gather stays in XLA (data-dependent rows).
    x_seq = jnp.take(emb_table, input_ids, axis=0)     # (B, S, E)
    x_seq = jnp.transpose(x_seq, (1, 0, 2))            # (S, B, E) time-major

    in_specs = [
        pl.BlockSpec((1, B, E), lambda t: (t, 0, 0)),  # x_t (streamed)
        pl.BlockSpec((L, B, H), lambda t: (0, 0, 0)),  # h0  (resident)
    ]
    operands = [x_seq, h0]
    for l, (wih_t, whh_t, bias) in enumerate(layers):
        e_in = E if l == 0 else H
        in_specs += [
            pl.BlockSpec((e_in, H), lambda t: (0, 0)),  # W_ih^T (resident)
            pl.BlockSpec((H, H), lambda t: (0, 0)),     # W_hh^T (resident)
            pl.BlockSpec((1, H), lambda t: (0, 0)),     # b_ih + b_hh
        ]
        operands += [wih_t, whh_t, bias.reshape(1, H)]

    grid_spec = pltpu.PrefetchScalarGridSpec(
        num_scalar_prefetch=0,
        grid=(S,),
        in_specs=in_specs,
        out_specs=pl.BlockSpec((1, L, B, H), lambda t: (t, 0, 0, 0)),
        scratch_shapes=[pltpu.VMEM((L, B, H), jnp.float32)],
    )

    states = pl.pallas_call(
        _make_encoder_kernel(L),
        out_shape=jax.ShapeDtypeStruct((S, L, B, H), jnp.float32),
        grid_spec=grid_spec,
        compiler_params=pltpu.CompilerParams(
            dimension_semantics=("arbitrary",)),  # sequential recurrence
    )(*operands)

    final_state = states[-1]   # current_state after the loop (non-LSTM cell)
    return states, final_state


def init_params(key, vocab, embed_dim, hidden, num_layers):
    """nn.Embedding + nn.RNN-shaped parameters (weights stored transposed,
    per-layer input/hidden biases pre-combined)."""
    keys = jax.random.split(key, 1 + 4 * num_layers)
    emb = jax.random.normal(keys[0], (vocab, embed_dim), jnp.float32)
    bound = 1.0 / jnp.sqrt(hidden)
    layers = []
    for l in range(num_layers):
        e_in = embed_dim if l == 0 else hidden
        k = keys[1 + 4 * l: 1 + 4 * (l + 1)]
        wih = jax.random.uniform(k[0], (hidden, e_in), jnp.float32, -bound, bound)
        whh = jax.random.uniform(k[1], (hidden, hidden), jnp.float32, -bound, bound)
        bih = jax.random.uniform(k[2], (hidden,), jnp.float32, -bound, bound)
        bhh = jax.random.uniform(k[3], (hidden,), jnp.float32, -bound, bound)
        layers.append((wih.T, whh.T, bih + bhh))
    return emb, layers


def _reference(input_ids, h0, params):
    """Pure-JAX replica of Encoder.forward (tanh RNN cell), full f32 matmuls."""
    emb_table, layers = params
    B, S = input_ids.shape
    hp = jax.lax.Precision.HIGHEST
    x_seq = jnp.transpose(jnp.take(emb_table, input_ids, axis=0), (1, 0, 2))
    h = h0
    states = []
    for t in range(S):
        x = x_seq[t]
        new_h = []
        for wih_t, whh_t, bias in layers:
            hl = jnp.tanh(jnp.dot(x, wih_t, precision=hp)
                          + jnp.dot(h[len(new_h)], whh_t, precision=hp) + bias)
            new_h.append(hl)
            x = hl
        h = jnp.stack(new_h, axis=0)
        states.append(h)
    return jnp.stack(states, axis=0), h


if __name__ == "__main__":
    # Small shapes consistent with the module: batch=2, seq=8, vocab=16,
    # embed_dim=16, hidden=32, encoder_layers=1 (Hyperparameters defaults).
    B, S, V, E, H, L = 2, 8, 16, 16, 32, 1

    key = jax.random.PRNGKey(0)
    k_ids, k_p = jax.random.split(key, 2)
    input_ids = jax.random.randint(k_ids, (B, S), 0, V, dtype=jnp.int32)
    params = init_params(k_p, V, E, H, L)
    h0 = jnp.zeros((L, B, H), jnp.float32)   # Encoder.getInitialState()

    states, final = encoder_forward(input_ids, h0, params)
    jax.block_until_ready((states, final))

    ref_states, ref_final = _reference(input_ids, h0, params)
    assert states.shape == (S, L, B, H) and final.shape == (L, B, H)
    assert jnp.allclose(states, ref_states, atol=1e-4, rtol=1e-4)
    assert jnp.allclose(final, ref_final, atol=1e-4, rtol=1e-4)

    print("KERNEL_OK")
</pallas_src>

<mosaic_0001>
module attributes {stable_mosaic.version = 11 : i64} {
  func.func @kernel(%arg0: i32, %arg1: memref<1x2x16xf32, #tpu.memory_space<vmem>>, %arg2: memref<1x2x32xf32, #tpu.memory_space<vmem>>, %arg3: memref<16x32xf32, #tpu.memory_space<vmem>>, %arg4: memref<32x32xf32, #tpu.memory_space<vmem>>, %arg5: memref<1x32xf32, #tpu.memory_space<vmem>>, %arg6: memref<1x1x2x32xf32, #tpu.memory_space<vmem>>, %arg7: memref<1x2x32xf32, #tpu.memory_space<vmem>>) attributes {dimension_semantics = [#tpu.dimension_semantics<arbitrary>], iteration_bounds = array<i64: 8>, scalar_prefetch = 0 : i64, scratch_operands = 1 : i64, tpu.core_type = #tpu.core_type<tc>, window_params = [{transform_indices = @transform_0, window_bounds = array<i64: 1, 2, 16>}, {pipeline_mode = #tpu.pipeline_mode<synchronous>, transform_indices = @transform_1, window_bounds = array<i64: 1, 2, 32>}, {pipeline_mode = #tpu.pipeline_mode<synchronous>, transform_indices = @transform_2, window_bounds = array<i64: 16, 32>}, {pipeline_mode = #tpu.pipeline_mode<synchronous>, transform_indices = @transform_3, window_bounds = array<i64: 32, 32>}, {pipeline_mode = #tpu.pipeline_mode<synchronous>, transform_indices = @transform_4, window_bounds = array<i64: 1, 32>}, {transform_indices = @transform_5, window_bounds = array<i64: 1, 1, 2, 32>}]} {
    %c0_i32 = arith.constant 0 : i32
    %0 = arith.cmpi eq, %arg0, %c0_i32 : i32
    %1 = arith.extui %0 : i1 to i32
    %c0_i32_0 = arith.constant 0 : i32
    %2 = arith.cmpi ne, %1, %c0_i32_0 : i32
    scf.if %2 {
      %c0_23 = arith.constant 0 : index
      %c0_24 = arith.constant 0 : index
      %c0_25 = arith.constant 0 : index
      %23 = vector.load %arg2[%c0_23, %c0_24, %c0_25] : memref<1x2x32xf32, #tpu.memory_space<vmem>>, vector<1x2x32xf32>
      %c0_26 = arith.constant 0 : index
      %c0_27 = arith.constant 0 : index
      %c0_28 = arith.constant 0 : index
      %24 = vector.load %arg7[%c0_26, %c0_27, %c0_28] : memref<1x2x32xf32, #tpu.memory_space<vmem>>, vector<1x2x32xf32>
      tpu.vector_store %arg7[%c0_26, %c0_27, %c0_28], %23 {strides = array<i32>} : memref<1x2x32xf32, #tpu.memory_space<vmem>>, vector<1x2x32xf32>,
    } else {
    }
    %c0 = arith.constant 0 : index
    %c0_1 = arith.constant 0 : index
    %c0_2 = arith.constant 0 : index
    %3 = vector.load %arg1[%c0, %c0_1, %c0_2] : memref<1x2x16xf32, #tpu.memory_space<vmem>>, vector<1x2x16xf32>
    %4 = vector.shape_cast %3 : vector<1x2x16xf32> to vector<2x16xf32>
    %c0_3 = arith.constant 0 : index
    %c0_4 = arith.constant 0 : index
    %5 = vector.load %arg3[%c0_3, %c0_4] : memref<16x32xf32, #tpu.memory_space<vmem>>, vector<16x32xf32>
    %c0_5 = arith.constant 0 : index
    %c0_6 = arith.constant 0 : index
    %6 = vector.load %arg4[%c0_5, %c0_6] : memref<32x32xf32, #tpu.memory_space<vmem>>, vector<32x32xf32>
    %c0_7 = arith.constant 0 : index
    %c0_8 = arith.constant 0 : index
    %7 = vector.load %arg5[%c0_7, %c0_8] : memref<1x32xf32, #tpu.memory_space<vmem>>, vector<1x32xf32>
    %c0_9 = arith.constant 0 : index
    %c0_10 = arith.constant 0 : index
    %c0_11 = arith.constant 0 : index
    %8 = vector.load %arg7[%c0_9, %c0_10, %c0_11] : memref<1x2x32xf32, #tpu.memory_space<vmem>>, vector<1x2x32xf32>
    %9 = vector.shape_cast %8 : vector<1x2x32xf32> to vector<2x32xf32>
    %cst = arith.constant dense<0.000000e+00> : vector<2x32xf32>
    %10 = tpu.matmul %4, %5, %cst {dimension_numbers = #tpu.dot_dimension_numbers<[1], [0], [0], [1], [0, 0, 1, 1], [], []>} : vector<2x16xf32>, vector<16x32xf32>, vector<2x32xf32> -> vector<2x32xf32>
    %cst_12 = arith.constant dense<0.000000e+00> : vector<2x32xf32>
    %11 = tpu.matmul %9, %6, %cst_12 {dimension_numbers = #tpu.dot_dimension_numbers<[1], [0], [0], [1], [0, 0, 1, 1], [], []>} : vector<2x32xf32>, vector<32x32xf32>, vector<2x32xf32> -> vector<2x32xf32>
    %12 = arith.addf %10, %11 : vector<2x32xf32>
    %13 = vector.broadcast %7 : vector<1x32xf32> to vector<2x32xf32>
    %14 = arith.addf %12, %13 : vector<2x32xf32>
    %15 = math.tanh %14 : vector<2x32xf32>
    %c0_13 = arith.constant 0 : index
    %c0_14 = arith.constant 0 : index
    %c0_15 = arith.constant 0 : index
    %16 = vector.load %arg7[%c0_13, %c0_14, %c0_15] : memref<1x2x32xf32, #tpu.memory_space<vmem>>, vector<1x2x32xf32>
    %17 = vector.shape_cast %16 : vector<1x2x32xf32> to vector<2x32xf32>
    %18 = vector.shape_cast %15 : vector<2x32xf32> to vector<1x2x32xf32>
    tpu.vector_store %arg7[%c0_13, %c0_14, %c0_15], %18 {strides = array<i32>} : memref<1x2x32xf32, #tpu.memory_space<vmem>>, vector<1x2x32xf32>,
    %c0_16 = arith.constant 0 : index
    %c0_17 = arith.constant 0 : index
    %c0_18 = arith.constant 0 : index
    %19 = vector.load %arg7[%c0_16, %c0_17, %c0_18] : memref<1x2x32xf32, #tpu.memory_space<vmem>>, vector<1x2x32xf32>
    %c0_19 = arith.constant 0 : index
    %c0_20 = arith.constant 0 : index
    %c0_21 = arith.constant 0 : index
    %c0_22 = arith.constant 0 : index
    %20 = vector.load %arg6[%c0_19, %c0_20, %c0_21, %c0_22] : memref<1x1x2x32xf32, #tpu.memory_space<vmem>>, vector<1x1x2x32xf32>
    %21 = vector.shape_cast %20 : vector<1x1x2x32xf32> to vector<1x2x32xf32>
    %22 = vector.shape_cast %19 : vector<1x2x32xf32> to vector<1x1x2x32xf32>
    tpu.vector_store %arg6[%c0_19, %c0_20, %c0_21, %c0_22], %22 {strides = array<i32>} : memref<1x1x2x32xf32, #tpu.memory_space<vmem>>, vector<1x1x2x32xf32>,
    return
  }
  func.func @transform_0(%arg0: i32) -> (i32, i32, i32) {
    %c0_i32 = arith.constant 0 : i32
    %c0_i32_0 = arith.constant 0 : i32
    %c0_i32_1 = arith.constant 0 : i32
    return %arg0, %c0_i32, %c0_i32_0 : i32, i32, i32
  }
  func.func @transform_1(%arg0: i32) -> (i32, i32, i32) {
    %c0_i32 = arith.constant 0 : i32
    %c0_i32_0 = arith.constant 0 : i32
    %c0_i32_1 = arith.constant 0 : i32
    %c0_i32_2 = arith.constant 0 : i32
    return %c0_i32, %c0_i32_0, %c0_i32_1 : i32, i32, i32
  }
  func.func @transform_2(%arg0: i32) -> (i32, i32) {
    %c0_i32 = arith.constant 0 : i32
    %c0_i32_0 = arith.constant 0 : i32
    %c0_i32_1 = arith.constant 0 : i32
    return %c0_i32, %c0_i32_0 : i32, i32
  }
  func.func @transform_3(%arg0: i32) -> (i32, i32) {
    %c0_i32 = arith.constant 0 : i32
    %c0_i32_0 = arith.constant 0 : i32
    %c0_i32_1 = arith.constant 0 : i32
    return %c0_i32, %c0_i32_0 : i32, i32
  }
  func.func @transform_4(%arg0: i32) -> (i32, i32) {
    %c0_i32 = arith.constant 0 : i32
    %c0_i32_0 = arith.constant 0 : i32
    %c0_i32_1 = arith.constant 0 : i32
    return %c0_i32, %c0_i32_0 : i32, i32
  }
  func.func @transform_5(%arg0: i32) -> (i32, i32, i32, i32) {
    %c0_i32 = arith.constant 0 : i32
    %c0_i32_0 = arith.constant 0 : i32
    %c0_i32_1 = arith.constant 0 : i32
    %c0_i32_2 = arith.constant 0 : i32
    return %arg0, %c0_i32, %c0_i32_0, %c0_i32_1 : i32, i32, i32, i32
  }
}

</mosaic_0001>

<llo_original>
// kernel: tpu_custom_call.1
$region0: #{tpu_custom_call.1}
  #allocation0 [shape = 'u32[]', space=smem, size = 0x4, offset = 0x4, fixed_abs, tag = 'smem constant byte address 0x4 - core index']
  #allocation1 [shape = 'u32[72,128]{1,0:T(1,128)}', space=vmem, size = 0x9000, scoped, tag = 'internal scratch']
  #allocation2 [shape = 'f32[1,2,32]{2,1,0:T(2,128)}', space=vmem, size = 0x400, scoped, tag = 'scratch operand']
  %s0 = inlined_call_operand.hbm [shape: f32[8,2,16], index: 0, kind: input, shape index: {}]
  %s1 = inlined_call_operand.hbm [shape: f32[1,2,32], index: 1, kind: input, shape index: {}]
  %s2 = inlined_call_operand.hbm [shape: f32[16,32], index: 2, kind: input, shape index: {}]
  %s3 = inlined_call_operand.hbm [shape: f32[32,32], index: 3, kind: input, shape index: {}]
  %s4 = inlined_call_operand.vmem [shape: f32[1,32], index: 4, kind: input, shape index: {}]
  %s5 = inlined_call_operand.hbm [shape: f32[8,1,2,32], index: 5, kind: output, shape index: {}]
  %s6 = sld [smem:[#allocation0]]
  $region73: #{tpu_custom_call.1} parent=0
    _
  %s8 = ssub.s32 1, %s6
  %s9 = scalar_select 0, %s8, %s6
  $region1: #{tpu_custom_call.1} parent=0
    #allocation3 [shape = 'u8[2048]{0}', space=vmem, size = 0x800, scoped, tag = 'input window, operand 0']
    #allocation4 [shape = 's32[2]{0}', space=sflag, size = 0x8, scoped, tag = 'scoped memory for tpu_custom_call.1']
    #allocation5 [shape = 's32[2]{0}', space=sflag, size = 0x8, scoped, tag = 'scoped memory for tpu_custom_call.1']
    #allocation6 [shape = 'u8[1024]{0}', space=vmem, size = 0x400, scoped, tag = 'input window, operand 1, single buffered']
    #allocation7 [shape = 's32[1]{0}', space=sflag, size = 0x4, scoped, tag = 'scoped memory for tpu_custom_call.1']
    #allocation8 [shape = 'u8[8192]{0}', space=vmem, size = 0x2000, scoped, tag = 'input window, operand 2, single buffered']
    #allocation9 [shape = 'u8[16384]{0}', space=vmem, size = 0x4000, scoped, tag = 'input window, operand 3, single buffered']
    #allocation10 [shape = 's32[1]{0}', space=sflag, size = 0x4, scoped, tag = 'scoped memory for tpu_custom_call.1']
    #allocation11 [shape = 'u8[2048]{0}', space=vmem, size = 0x800, scoped, tag = 'output window, operand 0']
    %10 = vsyncpa [#allocation4], 0
    %s11 = scalar_lea.sflag [#allocation4], 1
    %12 = vsyncpa %s11, 0
    %13 = vsyncpa [#allocation7], 0
    %14 = vsyncpa [#allocation10], 0
    %15 = vsyncpa [#allocation5], 0
    %s16 = scalar_lea.sflag [#allocation5], 1
    %17 = vsyncpa %s16, 0
    loop: start=0, step=1, limit=10
    $region2: #{tpu_custom_call.1} parent=1 // loop_pre_header
      _
    $region3: #{tpu_custom_call.1} parent=1 // loop_header
      %s19 = sphi 0, %s23
      %p20 = scmp.ge.s32.totalorder %s19, 10
      %s29 = sphi 0, %s31
      %s32 = sphi 0, %s29
      %s33 = sphi 0, %s32
      %s49 = sphi 0, %s33
      %s53 = sphi 0, %s53
      %s55 = sphi 0, %s53
      %s56 = sphi 0, %s55
      %s70 = sphi 0, %s56
      %s74 = sphi 0, %s74
      %s76 = sphi 0, %s74
      %s77 = sphi 0, %s76
      %s91 = sphi 0, %s77
      %s95 = sphi 0, %s95
      %s97 = sphi 0, %s95
      %s98 = sphi 0, %s97
      %s112 = sphi 0, %s98
      %s116 = sphi 0, %s116
      %s118 = sphi 0, %s116
      %s119 = sphi 0, %s118
      %s133 = sphi 0, %s119
      %s139 = sphi 0, %s141
      %s142 = sphi 0, %s139
      %s143 = sphi 0, %s142
      %s159 = sphi 0, %s143
    $region4: #{tpu_custom_call.1} parent=1 // loop_header_branch
      %22 = sbr.rel (%p20) target = $region8
    $region5: #{tpu_custom_call.1} parent=1 // loop_body
      %s24 = ssub.s32 %s19, 1
      %s25 = ssub.s32 %s19, 2
      %s26 = sadd.s32 %s19, 1
      %s27 = ssub.s32 %s19, %s26
      %p28 = scmp.eq.s32.totalorder %s27, 0
      %s30 = sadd.s32 %s29, 1
      %s31 = scalar_select %p28, %s29, %s30
      %p34 = pneg %p28
      %p35 = scmp.eq.s32.totalorder %s19, 7
      %p36 = por %p34, %p35
      %p37 = scmp.ne.s32.totalorder %s29, %s32
      %p38 = scmp.eq.s32.totalorder %s19, 0
      %p39 = por %p37, %p38
      %p40 = scmp.ne.s32.totalorder %s29, %s32
      %p41 = scmp.eq.s32.totalorder %s24, 7
      %p42 = por %p40, %p41
      %p43 = scmp.ne.s32.totalorder %s32, %s33
      %p44 = scmp.eq.s32.totalorder %s24, 0
      %p45 = por %p43, %p44
      %p46 = scmp.ne.s32.totalorder %s32, %s33
      %p47 = scmp.eq.s32.totalorder %s25, 7
      %p48 = por %p46, %p47
      %p50 = scmp.ne.s32.totalorder %s33, %s49
      %p51 = scmp.eq.s32.totalorder %s25, 0
      %p52 = por %p50, %p51
      %s54 = sadd.s32 %s53, 1
      %p57 = scmp.eq.s32.totalorder %s19, 7
      %p58 = scmp.ne.s32.totalorder %s53, %s55
      %p59 = scmp.eq.s32.totalorder %s19, 0
      %p60 = por %p58, %p59
      %p61 = scmp.ne.s32.totalorder %s53, %s55
      %p62 = scmp.eq.s32.totalorder %s24, 7
      %p63 = por %p61, %p62
      %p64 = scmp.ne.s32.totalorder %s55, %s56
      %p65 = scmp.eq.s32.totalorder %s24, 0
      %p66 = por %p64, %p65
      %p67 = scmp.ne.s32.totalorder %s55, %s56
      %p68 = scmp.eq.s32.totalorder %s25, 7
      %p69 = por %p67, %p68
      %p71 = scmp.ne.s32.totalorder %s56, %s70
      %p72 = scmp.eq.s32.totalorder %s25, 0
      %p73 = por %p71, %p72
      %s75 = sadd.s32 %s74, 1
      %p78 = scmp.eq.s32.totalorder %s19, 7
      %p79 = scmp.ne.s32.totalorder %s74, %s76
      %p80 = scmp.eq.s32.totalorder %s19, 0
      %p81 = por %p79, %p80
      %p82 = scmp.ne.s32.totalorder %s74, %s76
      %p83 = scmp.eq.s32.totalorder %s24, 7
      %p84 = por %p82, %p83
      %p85 = scmp.ne.s32.totalorder %s76, %s77
      %p86 = scmp.eq.s32.totalorder %s24, 0
      %p87 = por %p85, %p86
      %p88 = scmp.ne.s32.totalorder %s76, %s77
      %p89 = scmp.eq.s32.totalorder %s25, 7
      %p90 = por %p88, %p89
      %p92 = scmp.ne.s32.totalorder %s77, %s91
      %p93 = scmp.eq.s32.totalorder %s25, 0
      %p94 = por %p92, %p93
      %s96 = sadd.s32 %s95, 1
      %p99 = scmp.eq.s32.totalorder %s19, 7
      %p100 = scmp.ne.s32.totalorder %s95, %s97
      %p101 = scmp.eq.s32.totalorder %s19, 0
      %p102 = por %p100, %p101
      %p103 = scmp.ne.s32.totalorder %s95, %s97
      %p104 = scmp.eq.s32.totalorder %s24, 7
      %p105 = por %p103, %p104
      %p106 = scmp.ne.s32.totalorder %s97, %s98
      %p107 = scmp.eq.s32.totalorder %s24, 0
      %p108 = por %p106, %p107
      %p109 = scmp.ne.s32.totalorder %s97, %s98
      %p110 = scmp.eq.s32.totalorder %s25, 7
      %p111 = por %p109, %p110
      %p113 = scmp.ne.s32.totalorder %s98, %s112
      %p114 = scmp.eq.s32.totalorder %s25, 0
      %p115 = por %p113, %p114
      %s117 = sadd.s32 %s116, 1
      %p120 = scmp.eq.s32.totalorder %s19, 7
      %p121 = scmp.ne.s32.totalorder %s116, %s118
      %p122 = scmp.eq.s32.totalorder %s19, 0
      %p123 = por %p121, %p122
      %p124 = scmp.ne.s32.totalorder %s116, %s118
      %p125 = scmp.eq.s32.totalorder %s24, 7
      %p126 = por %p124, %p125
      %p127 = scmp.ne.s32.totalorder %s118, %s119
      %p128 = scmp.eq.s32.totalorder %s24, 0
      %p129 = por %p127, %p128
      %p130 = scmp.ne.s32.totalorder %s118, %s119
      %p131 = scmp.eq.s32.totalorder %s25, 7
      %p132 = por %p130, %p131
      %p134 = scmp.ne.s32.totalorder %s119, %s133
      %p135 = scmp.eq.s32.totalorder %s25, 0
      %p136 = por %p134, %p135
      %s137 = ssub.s32 %s19, %s26
      %p138 = scmp.eq.s32.totalorder %s137, 0
      %s140 = sadd.s32 %s139, 1
      %s141 = scalar_select %p138, %s139, %s140
      %p144 = pneg %p138
      %p145 = scmp.eq.s32.totalorder %s19, 7
      %p146 = por %p144, %p145
      %p147 = scmp.ne.s32.totalorder %s139, %s142
      %p148 = scmp.eq.s32.totalorder %s19, 0
      %p149 = por %p147, %p148
      %p150 = scmp.ne.s32.totalorder %s139, %s142
      %p151 = scmp.eq.s32.totalorder %s24, 7
      %p152 = por %p150, %p151
      %p153 = scmp.ne.s32.totalorder %s142, %s143
      %p154 = scmp.eq.s32.totalorder %s24, 0
      %p155 = por %p153, %p154
      %p156 = scmp.ne.s32.totalorder %s142, %s143
      %p157 = scmp.eq.s32.totalorder %s25, 7
      %p158 = por %p156, %p157
      %p160 = scmp.ne.s32.totalorder %s143, %s159
      %p161 = scmp.eq.s32.totalorder %s25, 0
      %p162 = por %p160, %p161
      %p163 = scmp.le.s32.totalorder 1, %s19
      %p164 = scmp.lt.s32.totalorder %s19, 9
      %p165 = pnand %p163, %p164
      %p166 = pneg %p165
      // Predicated region
      $region9: #{tpu_custom_call.1} parent=5 // pred_check
        _
      $region10: #{tpu_custom_call.1} parent=5 // pred_check_branch
        %168 = sbr.rel (%p165) target = $region12
      $region11: #{tpu_custom_call.1} parent=5 // pred_region
        %s169 = ssub.s32 %s19, 1
        // Predicated region
        $region13: #{tpu_custom_call.1} parent=11 // pred_check
          %p170 = pneg %p66
        $region14: #{tpu_custom_call.1} parent=11 // pred_check_branch
          %172 = sbr.rel (%p170) target = $region16
        $region15: #{tpu_custom_call.1} parent=11 // pred_region
          %174 = vsyncadd [#allocation7], 0
          %s176 = sshll.u32 %s1, 4
          %s177 = int_to_ptr.hbm [resolvable:$true] %s176
          %s178 = sshll.u32 [#allocation6], 4
          %s179 = int_to_ptr.vmem [resolvable:$true] %s178
          %181 = dma.hbm_to_vmem [thread:$0]  %s177, 32, %s179, [#allocation7]
        $region16: #{tpu_custom_call.1} parent=11 // pred_fallthru
          _
        // Predicated region
        $region17: #{tpu_custom_call.1} parent=11 // pred_check
          %p182 = pneg %p87
        $region18: #{tpu_custom_call.1} parent=11 // pred_check_branch
          %184 = sbr.rel (%p182) target = $region20
        $region19: #{tpu_custom_call.1} parent=11 // pred_region
          %186 = vsyncadd [#allocation7], 0
          %s187 = sshll.u32 %s2, 4
          %s188 = int_to_ptr.hbm [resolvable:$true] %s187
          %s189 = sshll.u32 [#allocation8], 4
          %s190 = int_to_ptr.vmem [resolvable:$true] %s189
          %195 = dma.hbm_to_vmem [thread:$0]  %s188, 256, %s190, [#allocation7], 128, 128, 8
        $region20: #{tpu_custom_call.1} parent=11 // pred_fallthru
          _
        // Predicated region
        $region21: #{tpu_custom_call.1} parent=11 // pred_check
          %p196 = pneg %p108
        $region22: #{tpu_custom_call.1} parent=11 // pred_check_branch
          %198 = sbr.rel (%p196) target = $region24
        $region23: #{tpu_custom_call.1} parent=11 // pred_region
          %200 = vsyncadd [#allocation10], 0
          %s201 = sshll.u32 %s3, 4
          %s202 = int_to_ptr.hbm [resolvable:$true] %s201
          %s203 = sshll.u32 [#allocation9], 4
          %s204 = int_to_ptr.vmem [resolvable:$true] %s203
          %209 = dma.hbm_to_vmem [thread:$0]  %s202, 512, %s204, [#allocation10], 128, 128, 8
        $region24: #{tpu_custom_call.1} parent=11 // pred_fallthru
          _
        // Predicated region
        $region25: #{tpu_custom_call.1} parent=11 // pred_check
          %p210 = pneg %p129
        $region26: #{tpu_custom_call.1} parent=11 // pred_check_branch
          %212 = sbr.rel (%p210) target = $region28
        $region27: #{tpu_custom_call.1} parent=11 // pred_region
          _
        $region28: #{tpu_custom_call.1} parent=11 // pred_fallthru
          _
      $region12: #{tpu_custom_call.1} parent=5 // pred_fallthru
        _
      %p213 = scmp.lt.s32.totalorder %s19, 8
      // Predicated region
      $region29: #{tpu_custom_call.1} parent=5 // pred_check
        %p214 = pneg %p213
      $region30: #{tpu_custom_call.1} parent=5 // pred_check_branch
        %216 = sbr.rel (%p214) target = $region32
      $region31: #{tpu_custom_call.1} parent=5 // pred_region
        // Predicated region
        $region33: #{tpu_custom_call.1} parent=31 // pred_check
          %p217 = pneg %p39
        $region34: #{tpu_custom_call.1} parent=31 // pred_check_branch
          %219 = sbr.rel (%p217) target = $region36
        $region35: #{tpu_custom_call.1} parent=31 // pred_region
          %s220 = sand.u32 %s29, 1
          %s221 = scalar_lea.sflag [#allocation4], %s220
          %s222 = sand.u32 %s29, 1
          %s223 = smul.addr %s222, 2
          %s224 = scalar_lea.vmem [#allocation3], %s223
          %226 = vsyncadd %s221, 0
          %s227 = smul.addr %s19, 2
          %s228 = scalar_lea.hbm %s0, %s227
          %s230 = sshll.u32 %s228, 4
          %s231 = int_to_ptr.hbm [resolvable:$true] %s230
          %s232 = sshll.u32 %s224, 4
          %s233 = int_to_ptr.vmem [resolvable:$true] %s232
          %235 = dma.hbm_to_vmem [thread:$0]  %s231, 32, %s233, %s221
        $region36: #{tpu_custom_call.1} parent=31 // pred_fallthru
          _
      $region32: #{tpu_custom_call.1} parent=5 // pred_fallthru
        _
      %p236 = scmp.le.s32.totalorder 1, %s19
      %p237 = scmp.lt.s32.totalorder %s19, 9
      %p238 = pnand %p236, %p237
      %p239 = pneg %p238
      // Predicated region
      $region37: #{tpu_custom_call.1} parent=5 // pred_check
        _
      $region38: #{tpu_custom_call.1} parent=5 // pred_check_branch
        %241 = sbr.rel (%p238) target = $region40
      $region39: #{tpu_custom_call.1} parent=5 // pred_region
        %s242 = ssub.s32 %s19, 1
        %s243 = sand.u32 %s32, 1
        %s244 = scalar_lea.sflag [#allocation4], %s243
        %s245 = sand.u32 %s32, 1
        %s246 = smul.addr %s245, 2
        %s247 = scalar_lea.vmem [#allocation3], %s246
        // Predicated region
        $region41: #{tpu_custom_call.1} parent=39 // pred_check
          %p248 = pneg %p45
        $region42: #{tpu_custom_call.1} parent=39 // pred_check_branch
          %250 = sbr.rel (%p248) target = $region44
        $region43: #{tpu_custom_call.1} parent=39 // pred_region
          %252 = dma.done %s244, 32
        $region44: #{tpu_custom_call.1} parent=39 // pred_fallthru
          _
        // Predicated region
        $region45: #{tpu_custom_call.1} parent=39 // pred_check
          %p253 = pneg %p66
        $region46: #{tpu_custom_call.1} parent=39 // pred_check_branch
          %255 = sbr.rel (%p253) target = $region48
        $region47: #{tpu_custom_call.1} parent=39 // pred_region
          %257 = dma.done [#allocation7], 32
        $region48: #{tpu_custom_call.1} parent=39 // pred_fallthru
          _
        // Predicated region
        $region49: #{tpu_custom_call.1} parent=39 // pred_check
          %p258 = pneg %p87
        $region50: #{tpu_custom_call.1} parent=39 // pred_check_branch
          %260 = sbr.rel (%p258) target = $region52
        $region51: #{tpu_custom_call.1} parent=39 // pred_region
          %262 = dma.done [#allocation7], 256
        $region52: #{tpu_custom_call.1} parent=39 // pred_fallthru
          _
        // Predicated region
        $region53: #{tpu_custom_call.1} parent=39 // pred_check
          %p263 = pneg %p108
        $region54: #{tpu_custom_call.1} parent=39 // pred_check_branch
          %265 = sbr.rel (%p263) target = $region56
        $region55: #{tpu_custom_call.1} parent=39 // pred_region
          %267 = dma.done [#allocation10], 512
        $region56: #{tpu_custom_call.1} parent=39 // pred_fallthru
          _
        %s268 = sand.u32 %s32, 1
        %s269 = scalar_lea.sflag [#allocation4], %s268
        %s270 = sand.u32 %s32, 1
        %s271 = smul.addr %s270, 2
        %s272 = scalar_lea.vmem [#allocation3], %s271
        %p273 = pneg %p45
        %p274 = pneg %p42
        %p275 = pneg %p66
        %p276 = pneg %p63
        %p277 = pneg %p87
        %p278 = pneg %p84
        %p279 = pneg %p108
        %p280 = pneg %p105
        %p281 = pneg %p129
        %p282 = pneg %p126
        %p283 = pneg %p155
        %p284 = pneg %p152
        %s285 = sand.u32 %s142, 1
        %s286 = scalar_lea.sflag [#allocation5], %s285
        %s287 = sand.u32 %s142, 1
        %s288 = smul.addr %s287, 2
        %s289 = scalar_lea.vmem [#allocation11], %s288
        %p290 = scmp.eq.s32.totalorder %s24, 0
        // Predicated region
        $region57: #{tpu_custom_call.1} parent=39 // pred_check
          %p291 = pneg %p290
        $region58: #{tpu_custom_call.1} parent=39 // pred_check_branch
          %293 = sbr.rel (%p291) target = $region60
        $region59: #{tpu_custom_call.1} parent=39 // pred_region
          %v294 = vld [vmem:[#allocation6] sm:$0x3]
          %vm295 = vcmask 254976
          %296 = vst.msk [vmem:[#allocation2] sm:$0x3] %vm295, %v294
        $region60: #{tpu_custom_call.1} parent=39 // pred_fallthru
          _
        %v297 = vld [vmem:[%s247] sm:$0x3]
        %v298 = vld [vmem:[#allocation8] sm:$0xff]
        %v299 = vld [vmem:[#allocation8 + $0x8] sm:$0xff]
        %v300 = vld [vmem:[#allocation9] sm:$0xff]
        %v301 = vld [vmem:[#allocation9 + $0x8] sm:$0xff]
        %v302 = vld [vmem:[#allocation9 + $0x10] sm:$0xff]
        %v303 = vld [vmem:[#allocation9 + $0x18] sm:$0xff]
        %v304 = vld [vmem:[%s4] sm:$0x1]
        %v305 = vld [vmem:[#allocation2] sm:$0x3]
        %vm306 = vcmask 261120
        %v308 = vsel %vm306, %v305, 0
        %310 = vmatpush.msra.mxu0 0.0
        %311 = vmatpush.msra.mxu0 0.0
        %312 = vmatpush.msra.mxu0 0.0
        %313 = vmatpush.msra.mxu0 0.0
        %314 = vmatpush.msra.mxu0 0.0
        %315 = vmatpush.msra.mxu0 0.0
        %316 = vmatpush.msra.mxu0 0.0
        %317 = vmatpush.msra.mxu0 0.0
        %318 = vmatpush.msra.mxu0 0.0
        %319 = vmatpush.msra.mxu0 0.0
        %320 = vmatpush.msra.mxu0 0.0
        %321 = vmatpush.msra.mxu0 0.0
        %322 = vmatpush.msra.mxu0 %v303
        %323 = vmatpush.msra.mxu0 %v302
        %324 = vmatpush.msra.mxu0 %v301
        %325 = vmatpush.msra.mxu0 %v300
        %326 = vmatmul.f32.gmra.mxu0 %v308
        %v327 = vpop.f32.mrf.mxu0
        %v328 = vadd.f32 0.0, %v327
        %329 = vdwg.mxu0
        %vm330 = vcmask 130048
        %v332 = vsel %vm330, %v297, 0
        %334 = vmatpush.msra.mxu0 0.0
        %335 = vmatpush.msra.mxu0 0.0
        %336 = vmatpush.msra.mxu0 0.0
        %337 = vmatpush.msra.mxu0 0.0
        %338 = vmatpush.msra.mxu0 0.0
        %339 = vmatpush.msra.mxu0 0.0
        %340 = vmatpush.msra.mxu0 0.0
        %341 = vmatpush.msra.mxu0 0.0
        %342 = vmatpush.msra.mxu0 0.0
        %343 = vmatpush.msra.mxu0 0.0
        %344 = vmatpush.msra.mxu0 0.0
        %345 = vmatpush.msra.mxu0 0.0
        %346 = vmatpush.msra.mxu0 0.0
        %347 = vmatpush.msra.mxu0 0.0
        %348 = vmatpush.msra.mxu0 %v299
        %349 = vmatpush.msra.mxu0 %v298
        %350 = vmatmul.f32.gmra.mxu0 %v332
        %v351 = vpop.f32.mrf.mxu0
        %v352 = vadd.f32 %v328, %v351
        %353 = vdwg.mxu0
        %v355 = vperm.slane %v304, 0
        %v357 = vadd.f32 %v352, %v355
        %v358 = vtanh.pop %v357
        %vm359 = vcmask 254976
        %360 = vst.msk [vmem:[#allocation2] sm:$0x3] %vm359, %v358
        %v361 = vld [vmem:[#allocation2] sm:$0x3]
        %362 = vst.msk [vmem:[%s289] sm:$0x3] %vm359, %v361
        %s363 = sand.u32 %s142, 1
        %s364 = scalar_lea.sflag [#allocation5], %s363
        %s365 = sand.u32 %s142, 1
        %s366 = smul.addr %s365, 2
        %s367 = scalar_lea.vmem [#allocation11], %s366
        // Predicated region
        $region61: #{tpu_custom_call.1} parent=39 // pred_check
          %p368 = pneg %p152
        $region62: #{tpu_custom_call.1} parent=39 // pred_check_branch
          %370 = sbr.rel (%p368) target = $region64
        $region63: #{tpu_custom_call.1} parent=39 // pred_region
          %372 = vsyncadd %s364, 0
          %s373 = smul.addr %s24, 2
          %s374 = scalar_lea.hbm %s5, %s373
          %s376 = sshll.u32 %s367, 4
          %s377 = int_to_ptr.vmem [resolvable:$true] %s376
          %s378 = sshll.u32 %s374, 4
          %s379 = int_to_ptr.hbm [resolvable:$true] %s378
          %381 = dma.vmem_to_hbm [thread:$0]  %s377, 32, %s379, %s364
        $region64: #{tpu_custom_call.1} parent=39 // pred_fallthru
          _
      $region40: #{tpu_custom_call.1} parent=5 // pred_fallthru
        _
      %p382 = scmp.le.s32.totalorder 2, %s19
      // Predicated region
      $region65: #{tpu_custom_call.1} parent=5 // pred_check
        %p383 = pneg %p382
      $region66: #{tpu_custom_call.1} parent=5 // pred_check_branch
        %385 = sbr.rel (%p383) target = $region68
      $region67: #{tpu_custom_call.1} parent=5 // pred_region
        %s386 = ssub.s32 %s19, 2
        // Predicated region
        $region69: #{tpu_custom_call.1} parent=67 // pred_check
          %p387 = pneg %p158
        $region70: #{tpu_custom_call.1} parent=67 // pred_check_branch
          %389 = sbr.rel (%p387) target = $region72
        $region71: #{tpu_custom_call.1} parent=67 // pred_region
          %s390 = sand.u32 %s143, 1
          %s391 = scalar_lea.sflag [#allocation5], %s390
          %s392 = sand.u32 %s143, 1
          %s393 = smul.addr %s392, 2
          %s394 = scalar_lea.vmem [#allocation11], %s393
          %396 = dma.done %s391, 32
        $region72: #{tpu_custom_call.1} parent=67 // pred_fallthru
          _
      $region68: #{tpu_custom_call.1} parent=5 // pred_fallthru
        _
    $region6: #{tpu_custom_call.1} parent=1 // loop_footer
      %s23 = sadd.s32 1, %s19
    $region7: #{tpu_custom_call.1} parent=1 // loop_footer_branch
      %18 = sbr.rel target = $region3
    $region8: #{tpu_custom_call.1} parent=1 // loop_exit
      _
    %397 = vsyncpa [#allocation4], 1
    %s398 = scalar_lea.sflag [#allocation4], 1
    %399 = vsyncpa %s398, 1
    %400 = vsyncpa [#allocation7], 1
    %401 = vsyncpa [#allocation10], 1
    %402 = vsyncpa [#allocation5], 1
    %s403 = scalar_lea.sflag [#allocation5], 1
    %404 = vsyncpa %s403, 1

</llo_original>
